<compile_context>
chip_gen: v5e
topology: v5e:2x2
jax: 0.10.0
libtpu: 0.0.40
codegen_flags: <defaults>
</compile_context>

<pallas_src>
import math
from functools import partial

import jax
import jax.numpy as jnp
from jax.experimental import pallas as pl
from jax.experimental.pallas import tpu as pltpu

# --- vocabulary constants (module-level in pnlp; defined synthetically here) ---
TOKENS = ["<pad>", "<mask>", "<cls>", "<sep>", "<unk>",
          "A", "C", "D", "E", "F", "G", "H", "I", "K", "L",
          "M", "N", "P", "Q", "R", "S", "T", "V", "W", "Y", "X"]
token_to_index = {t: i for i, t in enumerate(TOKENS)}
PADDING_IDX = token_to_index["<pad>"]  # 0


def _embed_kernel(ids_ref, emb2_ref, pe_ref, x_ref, *, v_pad, group):
    """One grid step processes `tile_r` rows of the lane-dense output slab.

    ids_ref : (tile_r, G)      int32   raw token ids, G tokens per output row
    emb2_ref: (G*V_pad, G*D)   float   block-diagonal (vocab-padded) emb table (resident)
    pe_ref  : (tile_r, G*D)    float32 positional encodings, tile-resident pattern
    x_ref   : (tile_r, G*D)    float32 output embeddings, lane-dense slab
    """
    tile_r = ids_ref.shape[0]
    gv = emb2_ref.shape[0]                      # G * V_pad (contraction dim)

    ids = ids_ref[...]                          # (tile_r, G) int32
    col = jax.lax.broadcasted_iota(jnp.int32, (tile_r, gv), 1)

    # Grouped one-hot: segment s of each row one-hot-encodes token s of that row
    # over its own V_pad-wide column range.  Segments are disjoint, so the sum of
    # the G comparisons is an exact 0/1 selector matrix.
    # (G <= 4 full-width compare+add passes — minor VALU cost; kept simple.)
    onehot = jnp.zeros((tile_r, gv), dtype=emb2_ref.dtype)
    for s in range(group):                      # statically unrolled (G = 128 // D)
        onehot = onehot + (col == (ids[:, s:s + 1] + s * v_pad)).astype(emb2_ref.dtype)

    # Row select via MXU matmul (exact: each output element is value + zeros),
    # then add positional encodings.  Dropout = identity (eval mode).
    x_ref[...] = (jnp.dot(onehot, emb2_ref[...], preferred_element_type=jnp.float32)
                  + pe_ref[...])


def build_nlp_embedding(emb_table, pe_table, *, padding_idx=PADDING_IDX,
                        row_tile_cap=1024):
    """Precompute static tables once; return a forward(batch_token) closure."""
    V, D = emb_table.shape

    # Lane packing: put G = 128 // D consecutive token embeddings into one
    # 128-lane output row so x stores are unmasked and lane-dense.
    if D % 128 == 0:
        group = 1                               # already lane-dense
    elif 128 % D == 0:
        group = 128 // D
    else:
        group = 1                               # TODO(synk): pad D to a lane multiple
    lane_d = group * D

    # Pad vocab to a sublane multiple (padded rows are zero -> never selected).
    v_pad = ((V + 31) // 32) * 32
    emb_p = jnp.zeros((v_pad, D), emb_table.dtype).at[:V, :].set(emb_table)
    # Block-diagonal table so G tokens are gathered by a single MXU matmul.
    emb2 = emb_p if group == 1 else jnp.kron(jnp.eye(group, dtype=emb_table.dtype), emb_p)
    emb2_bytes = emb2.size * emb2.dtype.itemsize

    pe_f32 = pe_table.astype(jnp.float32)       # (max_len, D)

    def forward(batch_token):
        B, L = batch_token.shape
        BL = B * L

        # Can the PE block be tile-resident?  Requires whole sequences per packed
        # row (L % G == 0) and a not-absurd per-sequence period.
        pe_resident = (L % group == 0) and (math.lcm(8, max(L // group, 1)) <= row_tile_cap)
        period = L // group if pe_resident else 8
        base = math.lcm(8, period) if pe_resident else 8

        R_raw = -(-BL // group)                 # rows of real work (ceil)

        # Tile rows: as big as the cap allows, but no bigger than the (padded)
        # real work; keep >=2 grid steps when there's enough work (v7x dual-TC).
        cap = row_tile_cap
        if R_raw >= 2 * base:
            cap = min(cap, max(base, (R_raw // 2) // base * base))
        cap = max(base, cap // base * base)
        tile_r = min(cap, -(-R_raw // base) * base)
        R_pad = -(-R_raw // tile_r) * tile_r
        n_tok = R_pad * group
        grid = (R_pad // tile_r,)

        # Token ids packed as (R_pad, G) int32, padded with <pad> tokens so the
        # slab is always lane-dense and 8-row aligned (padded rows are sliced off).
        ids_flat = jnp.full((n_tok,), padding_idx, dtype=jnp.int32)
        ids_flat = ids_flat.at[:BL].set(batch_token.astype(jnp.int32).reshape(-1))
        ids = ids_flat.reshape(R_pad, group)

        if pe_resident:
            # One tile-sized PE block, identical for every tile -> constant
            # index_map -> fetched once, resident like emb2.
            pe_seq = pe_f32[:L].reshape(period, lane_d)
            pe_in = jnp.tile(pe_seq, (tile_r // period, 1))           # (tile_r, G*D)
            pe_spec = pl.BlockSpec((tile_r, lane_d), lambda i: (0, 0))
        else:
            # Fallback: stream the PE slab per tile.
            pos = jnp.arange(n_tok, dtype=jnp.int32) % L
            pe_in = pe_f32[pos].reshape(R_pad, lane_d)
            pe_spec = pl.BlockSpec((tile_r, lane_d), lambda i: (i, 0))

        # Explicit scoped-VMEM limit sized to the double-buffered blocks + the
        # resident tables, with headroom (v5e default is only 16 MiB).
        blk_bytes = tile_r * lane_d * 4
        ids_bytes = tile_r * group * 4
        vmem_limit = int(2 * blk_bytes          # x out, double-buffered
                         + 2 * blk_bytes        # pe buffers
                         + 2 * ids_bytes
                         + 2 * emb2_bytes
                         + (4 << 20))
        vmem_limit = max(vmem_limit, 16 << 20)

        kernel = partial(_embed_kernel, v_pad=v_pad, group=group)

        x_slab = pl.pallas_call(
            kernel,
            out_shape=jax.ShapeDtypeStruct((R_pad, lane_d), jnp.float32),
            grid_spec=pltpu.PrefetchScalarGridSpec(
                num_scalar_prefetch=0,
                grid=grid,
                in_specs=[
                    pl.BlockSpec((tile_r, group), lambda i: (i, 0)),   # token ids
                    pl.BlockSpec(emb2.shape, lambda i: (0, 0)),        # small table, resident
                    pe_spec,                                           # PE (resident or streamed)
                ],
                out_specs=pl.BlockSpec((tile_r, lane_d), lambda i: (i, 0)),
            ),
            compiler_params=pltpu.CompilerParams(
                dimension_semantics=("parallel",),
                vmem_limit_bytes=vmem_limit),
        )(ids, emb2, pe_in)

        x = x_slab.reshape(n_tok, D)[:BL].reshape(B, L, D)

        # Padding mask, computed outside the kernel with a trivial XLA compare.
        # Matches torch: padding_masks.unsqueeze(2).expand -> mask[b, i, j]
        # depends on token[b, i].
        # TODO(synk): downstream consumers should take the (B, L) keep vector;
        # the materialized O(B*L*L) float32 mask dominates HBM traffic at scale.
        keep = (batch_token != padding_idx).astype(jnp.float32)        # (B, L)
        mask = jnp.broadcast_to(keep[:, :, None], (B, L, L))
        return x, mask

    return forward


def make_positional_encoding(max_len, d_model):
    """Same construction as PositionalEmbedding.__init__ (PyTorch semantics)."""
    position = jnp.arange(max_len, dtype=jnp.float32)[:, None]            # (max_len, 1)
    div_term = jnp.exp(jnp.arange(0, d_model, 2, dtype=jnp.float32)
                       * -(math.log(10000.0) / d_model))                  # (d_model/2,)
    pe = jnp.zeros((max_len, d_model), dtype=jnp.float32)
    pe = pe.at[:, 0::2].set(jnp.sin(position * div_term))
    pe = pe.at[:, 1::2].set(jnp.cos(position * div_term))
    return pe


if __name__ == "__main__":
    # Small shapes consistent with the module's forward.
    B, L = 2, 8            # batch, sequence length
    D = 32                 # embedding_dim
    MAX_LEN = 64           # max_len
    V = len(token_to_index)

    key = jax.random.PRNGKey(0)
    k_emb, k_tok = jax.random.split(key)

    # Deterministic parameter init: nn.Embedding(V, D, padding_idx=PADDING_IDX)
    emb_table = jax.random.normal(k_emb, (V, D), dtype=jnp.float32)
    emb_table = emb_table.at[PADDING_IDX].set(0.0)   # padding row is zero

    pe_table = make_positional_encoding(MAX_LEN, D)

    # Deterministic tokens; last two positions of each sequence are padding.
    batch_token = jax.random.randint(k_tok, (B, L), 1, V, dtype=jnp.int32)
    batch_token = batch_token.at[:, -2:].set(PADDING_IDX)

    nlp_embedding_forward = build_nlp_embedding(emb_table, pe_table)
    x, mask = nlp_embedding_forward(batch_token)
    jax.block_until_ready((x, mask))

    # Reference (plain JAX) check of the forward-pass semantics.
    ref_x = emb_table[batch_token] + pe_table[:L][None, :, :]
    ref_mask = jnp.broadcast_to(
        jnp.where(batch_token == PADDING_IDX, 0.0, 1.0)[:, :, None], (B, L, L))

    assert x.shape == (B, L, D) and x.dtype == jnp.float32
    assert mask.shape == (B, L, L) and mask.dtype == jnp.float32
    assert jnp.allclose(x, ref_x, atol=1e-5, rtol=1e-5)
    assert jnp.allclose(mask, ref_mask)

    print("KERNEL_OK")
</pallas_src>

<mosaic_0001>
module attributes {stable_mosaic.version = 11 : i64} {
  func.func @_embed_kernel(%arg0: i32, %arg1: memref<8x4xi32, #tpu.memory_space<vmem>>, %arg2: memref<128x128xf32, #tpu.memory_space<vmem>>, %arg3: memref<8x128xf32, #tpu.memory_space<vmem>>, %arg4: memref<8x128xf32, #tpu.memory_space<vmem>>) attributes {dimension_semantics = [#tpu.dimension_semantics<parallel>], iteration_bounds = array<i64: 1>, scalar_prefetch = 0 : i64, scratch_operands = 0 : i64, tpu.core_type = #tpu.core_type<tc>, window_params = [{transform_indices = @transform_0, window_bounds = array<i64: 8, 4>}, {pipeline_mode = #tpu.pipeline_mode<synchronous>, transform_indices = @transform_1, window_bounds = array<i64: 128, 128>}, {pipeline_mode = #tpu.pipeline_mode<synchronous>, transform_indices = @transform_2, window_bounds = array<i64: 8, 128>}, {transform_indices = @transform_3, window_bounds = array<i64: 8, 128>}]} {
    %c0 = arith.constant 0 : index
    %c0_0 = arith.constant 0 : index
    %0 = vector.load %arg1[%c0, %c0_0] : memref<8x4xi32, #tpu.memory_space<vmem>>, vector<8x4xi32>
    %1 = tpu.iota {dimensions = array<i32: 1>} : vector<8x128xi32>
    %cst = arith.constant 0.000000e+00 : f32
    %2 = vector.broadcast %cst : f32 to vector<8x128xf32>
    %3 = vector.extract_strided_slice %0 {offsets = [0, 0], sizes = [8, 1], strides = [1, 1]} : vector<8x4xi32> to vector<8x1xi32>
    %c0_i32 = arith.constant 0 : i32
    %4 = vector.broadcast %c0_i32 : i32 to vector<8x1xi32>
    %5 = arith.addi %3, %4 : vector<8x1xi32>
    %6 = vector.broadcast %5 : vector<8x1xi32> to vector<8x128xi32>
    %7 = arith.cmpi eq, %1, %6 : vector<8x128xi32>
    %8 = arith.extui %7 : vector<8x128xi1> to vector<8x128xi32>
    %9 = arith.sitofp %8 : vector<8x128xi32> to vector<8x128xf32>
    %10 = arith.addf %2, %9 : vector<8x128xf32>
    %11 = vector.extract_strided_slice %0 {offsets = [0, 1], sizes = [8, 1], strides = [1, 1]} : vector<8x4xi32> to vector<8x1xi32>
    %c32_i32 = arith.constant 32 : i32
    %12 = vector.broadcast %c32_i32 : i32 to vector<8x1xi32>
    %13 = arith.addi %11, %12 : vector<8x1xi32>
    %14 = vector.broadcast %13 : vector<8x1xi32> to vector<8x128xi32>
    %15 = arith.cmpi eq, %1, %14 : vector<8x128xi32>
    %16 = arith.extui %15 : vector<8x128xi1> to vector<8x128xi32>
    %17 = arith.sitofp %16 : vector<8x128xi32> to vector<8x128xf32>
    %18 = arith.addf %10, %17 : vector<8x128xf32>
    %19 = vector.extract_strided_slice %0 {offsets = [0, 2], sizes = [8, 1], strides = [1, 1]} : vector<8x4xi32> to vector<8x1xi32>
    %c64_i32 = arith.constant 64 : i32
    %20 = vector.broadcast %c64_i32 : i32 to vector<8x1xi32>
    %21 = arith.addi %19, %20 : vector<8x1xi32>
    %22 = vector.broadcast %21 : vector<8x1xi32> to vector<8x128xi32>
    %23 = arith.cmpi eq, %1, %22 : vector<8x128xi32>
    %24 = arith.extui %23 : vector<8x128xi1> to vector<8x128xi32>
    %25 = arith.sitofp %24 : vector<8x128xi32> to vector<8x128xf32>
    %26 = arith.addf %18, %25 : vector<8x128xf32>
    %27 = vector.extract_strided_slice %0 {offsets = [0, 3], sizes = [8, 1], strides = [1, 1]} : vector<8x4xi32> to vector<8x1xi32>
    %c96_i32 = arith.constant 96 : i32
    %28 = vector.broadcast %c96_i32 : i32 to vector<8x1xi32>
    %29 = arith.addi %27, %28 : vector<8x1xi32>
    %30 = vector.broadcast %29 : vector<8x1xi32> to vector<8x128xi32>
    %31 = arith.cmpi eq, %1, %30 : vector<8x128xi32>
    %32 = arith.extui %31 : vector<8x128xi1> to vector<8x128xi32>
    %33 = arith.sitofp %32 : vector<8x128xi32> to vector<8x128xf32>
    %34 = arith.addf %26, %33 : vector<8x128xf32>
    %c0_1 = arith.constant 0 : index
    %c0_2 = arith.constant 0 : index
    %35 = vector.load %arg2[%c0_1, %c0_2] : memref<128x128xf32, #tpu.memory_space<vmem>>, vector<128x128xf32>
    %cst_3 = arith.constant dense<0.000000e+00> : vector<8x128xf32>
    %36 = tpu.matmul %34, %35, %cst_3 {dimension_numbers = #tpu.dot_dimension_numbers<[1], [0], [0], [1], [0, 0, 1, 1], [], []>} : vector<8x128xf32>, vector<128x128xf32>, vector<8x128xf32> -> vector<8x128xf32>
    %c0_4 = arith.constant 0 : index
    %c0_5 = arith.constant 0 : index
    %37 = vector.load %arg3[%c0_4, %c0_5] : memref<8x128xf32, #tpu.memory_space<vmem>>, vector<8x128xf32>
    %38 = arith.addf %36, %37 : vector<8x128xf32>
    %c0_6 = arith.constant 0 : index
    %c0_7 = arith.constant 0 : index
    %39 = vector.load %arg4[%c0_6, %c0_7] : memref<8x128xf32, #tpu.memory_space<vmem>>, vector<8x128xf32>
    tpu.vector_store %arg4[%c0_6, %c0_7], %38 {strides = array<i32>} : memref<8x128xf32, #tpu.memory_space<vmem>>, vector<8x128xf32>,
    return
  }
  func.func @transform_0(%arg0: i32) -> (i32, i32) {
    %c0_i32 = arith.constant 0 : i32
    %c0_i32_0 = arith.constant 0 : i32
    return %arg0, %c0_i32 : i32, i32
  }
  func.func @transform_1(%arg0: i32) -> (i32, i32) {
    %c0_i32 = arith.constant 0 : i32
    %c0_i32_0 = arith.constant 0 : i32
    %c0_i32_1 = arith.constant 0 : i32
    return %c0_i32, %c0_i32_0 : i32, i32
  }
  func.func @transform_2(%arg0: i32) -> (i32, i32) {
    %c0_i32 = arith.constant 0 : i32
    %c0_i32_0 = arith.constant 0 : i32
    %c0_i32_1 = arith.constant 0 : i32
    return %c0_i32, %c0_i32_0 : i32, i32
  }
  func.func @transform_3(%arg0: i32) -> (i32, i32) {
    %c0_i32 = arith.constant 0 : i32
    %c0_i32_0 = arith.constant 0 : i32
    return %arg0, %c0_i32 : i32, i32
  }
}

</mosaic_0001>

<llo_original>
// kernel: tpu_custom_call.1
$region0: #{tpu_custom_call.1}
  #allocation0 [shape = 'u32[]', space=smem, size = 0x4, offset = 0x4, fixed_abs, tag = 'smem constant byte address 0x4 - core index']
  #allocation1 [shape = 'u32[72,128]{1,0:T(1,128)}', space=vmem, size = 0x9000, scoped, tag = 'internal scratch']
  %s0 = inlined_call_operand.vmem [shape: s32[8,4], index: 0, kind: input, shape index: {}]
  %s1 = inlined_call_operand.hbm [shape: f32[128,128], index: 1, kind: input, shape index: {}]
  %s2 = inlined_call_operand.vmem [shape: f32[8,128], index: 2, kind: input, shape index: {}]
  %s3 = inlined_call_operand.hbm [shape: f32[8,128], index: 3, kind: output, shape index: {}]
  %s4 = sld [smem:[#allocation0]]
  $region26: #{tpu_custom_call.1} parent=0
    _
  %s6 = ssub.s32 1, %s4
  %s7 = scalar_select 0, %s6, %s4
  $region1: #{tpu_custom_call.1} parent=0
    #allocation2 [shape = 'u8[65536]{0}', space=vmem, size = 0x10000, scoped, tag = 'input window, operand 1, single buffered']
    #allocation3 [shape = 's32[1]{0}', space=sflag, size = 0x4, scoped, tag = 'scoped memory for tpu_custom_call.1']
    #allocation4 [shape = 's32[1]{0}', space=sflag, size = 0x4, scoped, tag = 'scoped memory for tpu_custom_call.1']
    #allocation5 [shape = 'u8[4096]{0}', space=vmem, size = 0x1000, scoped, tag = 'output window, operand 0, single buffered']
    %8 = vsyncpa [#allocation3], 0
    %9 = vsyncpa [#allocation4], 0
    // Predicated region
    $region2: #{tpu_custom_call.1} parent=1 // pred_check
      _
    $region3: #{tpu_custom_call.1} parent=1 // pred_check_branch
      %11 = sbr.rel (0) target = $region5
    $region4: #{tpu_custom_call.1} parent=1 // pred_region
      _
    $region5: #{tpu_custom_call.1} parent=1 // pred_fallthru
      _
    // Predicated region
    $region6: #{tpu_custom_call.1} parent=1 // pred_check
      _
    $region7: #{tpu_custom_call.1} parent=1 // pred_check_branch
      %13 = sbr.rel (0) target = $region9
    $region8: #{tpu_custom_call.1} parent=1 // pred_region
      %15 = vsyncadd [#allocation3], 0
      %s16 = sshll.u32 %s1, 4
      %s17 = int_to_ptr.hbm [resolvable:$true] %s16
      %s18 = sshll.u32 [#allocation2], 4
      %s19 = int_to_ptr.vmem [resolvable:$true] %s18
      %24 = dma.hbm_to_vmem [thread:$0]  %s17, 2048, %s19, [#allocation3], 128, 128, 8
    $region9: #{tpu_custom_call.1} parent=1 // pred_fallthru
      _
    // Predicated region
    $region10: #{tpu_custom_call.1} parent=1 // pred_check
      _
    $region11: #{tpu_custom_call.1} parent=1 // pred_check_branch
      %26 = sbr.rel (0) target = $region13
    $region12: #{tpu_custom_call.1} parent=1 // pred_region
      _
    $region13: #{tpu_custom_call.1} parent=1 // pred_fallthru
      _
    // Predicated region
    $region14: #{tpu_custom_call.1} parent=1 // pred_check
      _
    $region15: #{tpu_custom_call.1} parent=1 // pred_check_branch
      %28 = sbr.rel (0) target = $region17
    $region16: #{tpu_custom_call.1} parent=1 // pred_region
      %30 = dma.done [#allocation3], 2048
    $region17: #{tpu_custom_call.1} parent=1 // pred_fallthru
      _
    %v31 = vld [vmem:[%s0] sm:$0xff]
    %v32 = vlaneseq
    %v33 = vand.u32 %v32, 127
    %34 = vset.pattern.permute.xlu0 0
    %35 = vperm.xlu0 %34, %v31
    %v36 = vpop.permute.xlu0 %35
    %vm37 = vcmp.eq.s32.totalorder %v33, %v36
    %v38 = vsel %vm37, 1, 0
    %v39 = vcvt.s32.f32 %v38
    %v40 = vadd.f32 %v39, 0.0
    %v41 = vadd.s32 %v31, 32
    %42 = vset.pattern.permute.xlu0 1
    %43 = vperm.xlu0 %42, %v41
    %v44 = vpop.permute.xlu0 %43
    %vm45 = vcmp.eq.s32.totalorder %v33, %v44
    %v46 = vsel %vm45, 1, 0
    %v47 = vcvt.s32.f32 %v46
    %v48 = vadd.f32 %v40, %v47
    %v49 = vadd.s32 %v31, 64
    %50 = vset.pattern.permute.xlu0 2
    %51 = vperm.xlu0 %50, %v49
    %v52 = vpop.permute.xlu0 %51
    %vm53 = vcmp.eq.s32.totalorder %v33, %v52
    %v54 = vsel %vm53, 1, 0
    %v55 = vcvt.s32.f32 %v54
    %v56 = vadd.f32 %v48, %v55
    %v57 = vadd.s32 %v31, 96
    %58 = vset.pattern.permute.xlu0 3
    %59 = vperm.xlu0 %58, %v57
    %v60 = vpop.permute.xlu0 %59
    %vm61 = vcmp.eq.s32.totalorder %v33, %v60
    %v62 = vsel %vm61, 1, 0
    %v63 = vcvt.s32.f32 %v62
    %v64 = vadd.f32 %v56, %v63
    %v65 = vld [vmem:[#allocation2] sm:$0xff]
    %v66 = vld [vmem:[#allocation2 + $0x8] sm:$0xff]
    %v67 = vld [vmem:[#allocation2 + $0x10] sm:$0xff]
    %v68 = vld [vmem:[#allocation2 + $0x18] sm:$0xff]
    %v69 = vld [vmem:[#allocation2 + $0x20] sm:$0xff]
    %v70 = vld [vmem:[#allocation2 + $0x28] sm:$0xff]
    %v71 = vld [vmem:[#allocation2 + $0x30] sm:$0xff]
    %v72 = vld [vmem:[#allocation2 + $0x38] sm:$0xff]
    %v73 = vld [vmem:[#allocation2 + $0x40] sm:$0xff]
    %v74 = vld [vmem:[#allocation2 + $0x48] sm:$0xff]
    %v75 = vld [vmem:[#allocation2 + $0x50] sm:$0xff]
    %v76 = vld [vmem:[#allocation2 + $0x58] sm:$0xff]
    %v77 = vld [vmem:[#allocation2 + $0x60] sm:$0xff]
    %v78 = vld [vmem:[#allocation2 + $0x68] sm:$0xff]
    %v79 = vld [vmem:[#allocation2 + $0x70] sm:$0xff]
    %v80 = vld [vmem:[#allocation2 + $0x78] sm:$0xff]
    %v81 = vld [vmem:[%s2] sm:$0xff]
    %82 = vmatpush.msra.mxu0 %v80
    %83 = vmatpush.msra.mxu0 %v79
    %84 = vmatpush.msra.mxu0 %v78
    %85 = vmatpush.msra.mxu0 %v77
    %86 = vmatpush.msra.mxu0 %v76
    %87 = vmatpush.msra.mxu0 %v75
    %88 = vmatpush.msra.mxu0 %v74
    %89 = vmatpush.msra.mxu0 %v73
    %90 = vmatpush.msra.mxu0 %v72
    %91 = vmatpush.msra.mxu0 %v71
    %92 = vmatpush.msra.mxu0 %v70
    %93 = vmatpush.msra.mxu0 %v69
    %94 = vmatpush.msra.mxu0 %v68
    %95 = vmatpush.msra.mxu0 %v67
    %96 = vmatpush.msra.mxu0 %v66
    %97 = vmatpush.msra.mxu0 %v65
    %98 = vmatmul.f32.gmra.mxu0 %v64
    %v99 = vpop.f32.mrf.mxu0
    %v100 = vadd.f32 %v81, %v99
    %101 = vdwg.mxu0
    %102 = vst [vmem:[#allocation5] sm:$0xff] %v100
    // Predicated region
    $region18: #{tpu_custom_call.1} parent=1 // pred_check
      _
    $region19: #{tpu_custom_call.1} parent=1 // pred_check_branch
      %104 = sbr.rel (0) target = $region21
    $region20: #{tpu_custom_call.1} parent=1 // pred_region
      %106 = vsyncadd [#allocation4], 0
      %s108 = sshll.u32 [#allocation5], 4
      %s109 = int_to_ptr.vmem [resolvable:$true] %s108
      %s110 = sshll.u32 %s3, 4
      %s111 = int_to_ptr.hbm [resolvable:$true] %s110
      %113 = dma.vmem_to_hbm [thread:$0]  %s109, 128, %s111, [#allocation4]
    $region21: #{tpu_custom_call.1} parent=1 // pred_fallthru
      _
    // Predicated region
    $region22: #{tpu_custom_call.1} parent=1 // pred_check
      _
    $region23: #{tpu_custom_call.1} parent=1 // pred_check_branch
      %115 = sbr.rel (0) target = $region25
    $region24: #{tpu_custom_call.1} parent=1 // pred_region
      %117 = dma.done [#allocation4], 128
    $region25: #{tpu_custom_call.1} parent=1 // pred_fallthru
      _
    %118 = vsyncpa [#allocation3], 1
    %119 = vsyncpa [#allocation4], 1

</llo_original>
